<compile_context>
chip_gen: v7x
topology: tpu7x:2x2x1
jax: 0.10.0
libtpu: 0.0.40
codegen_flags: <defaults>
</compile_context>

<pallas_src>
import jax
import jax.numpy as jnp
import numpy as np
from jax.experimental import pallas as pl
from jax.experimental.pallas import tpu as pltpu

# ----------------------------------------------------------------------------
# "drive_functions" configuration (synthetic, deterministic)
# ----------------------------------------------------------------------------
ACC_QUEUE_SIZE = 8
STEER_QUEUE_SIZE = 8
STEER_QUEUE_SIZE_CORE = 4
ACC_NORMALIZE = 0.5
STEER_NORMALIZE = 2.0
VEL_NORMALIZE = 0.1

# architecture constants from the module
DIM_ACC_LAYER_1 = 16
DIM_ACC_LAYER_2 = 16
DIM_STEER_LAYER_1_HEAD = 32
DIM_STEER_LAYER_1_TAIL = 16
DIM_STEER_LAYER_2 = 8
HIDDEN_LAYER_SIZES = (32, 16)
OUT_DIM = 6

# static gather indices (exactly as computed in __init__)
ACC_INPUT_INDEX = np.concatenate(([1], np.arange(ACC_QUEUE_SIZE) + 3))
STEER_INPUT_INDEX = np.concatenate(
    ([2], np.arange(STEER_QUEUE_SIZE_CORE) + ACC_QUEUE_SIZE + 3)
)
STEER_INPUT_INDEX_FULL = np.arange(STEER_QUEUE_SIZE) + ACC_QUEUE_SIZE + 3

IN_FEATURES = 3 + ACC_QUEUE_SIZE + STEER_QUEUE_SIZE  # columns of x (=19)

D1 = DIM_ACC_LAYER_1 + DIM_STEER_LAYER_1_HEAD + DIM_STEER_LAYER_1_TAIL  # 64
D2 = DIM_ACC_LAYER_2 + DIM_STEER_LAYER_2                                # 24
H0 = HIDDEN_LAYER_SIZES[0]                                              # 32
H1 = HIDDEN_LAYER_SIZES[1]                                              # 16


def _round_up(n, m):
    return ((n + m - 1) // m) * m


# ----------------------------------------------------------------------------
# Pallas kernel: whole fused MLP forward for one (TILE_B, 19) batch tile
# ----------------------------------------------------------------------------
def _drive_nn_kernel(
    x_ref,
    w1_ref, b1_ref,          # fused layer-1:     (19, 64),  (1, 64)
    w2_ref, b2_ref,          # block-diag L2:     (64, 24),  (1, 24)
    wl0v_ref,                # vel row (f32):     (1, 32)   (VEL_NORMALIZE folded)
    wl0f_ref, bl0_ref,       # [Wl0 | Wf]:        (24, 38),  (1, 32)
    wl1_ref, bl1_ref,        # stack[2]:          (32, 16),  (1, 16)
    wfp_ref, bf_ref,         # finalize (pre):    (16, 6),   (1, 6)
    out_ref,
):
    f32 = jnp.float32
    cdt = w1_ref.dtype  # MXU operand dtype (f32 or bf16); accumulation is f32

    def relu(v):
        return jnp.maximum(v, 0.0)

    def dot(a, w_ref):
        return jnp.dot(a.astype(cdt), w_ref[...], preferred_element_type=f32)

    x = x_ref[...]  # (TB, 19), input's native dtype (cast per-dot)

    # fused first layer: [acc1 | steer_head | steer_tail]              (TB, 64)
    h1 = relu(dot(x, w1_ref) + b1_ref[...])

    # fused block-diagonal second layer: [acc2 | steer2]               (TB, 24)
    # (dropout p = 0.0 -> identity)
    a2s2 = relu(dot(h1, w2_ref) + b2_ref[...])

    # single MXU pass of a2s2 through [Wl0 | Wf]                       (TB, 38)
    t = dot(a2s2, wl0f_ref)

    # linear_relu_stack[0]: vel path is a K=1 contraction -> VPU, f32
    vel = x[:, 0:1].astype(f32) * wl0v_ref[...]                      # (TB, 32)
    h0 = relu(vel + t[:, 0:H0] + bl0_ref[...])
    pre = relu(dot(h0, wl1_ref) + bl1_ref[...])                      # (TB, 16)

    # finalize: pre-part via MXU, a2s2-part already in lanes [32:38] of t
    pred = dot(pre, wfp_ref) + t[:, H0:H0 + OUT_DIM] + bf_ref[...]
    out_ref[...] = pred.astype(out_ref.dtype)


# ----------------------------------------------------------------------------
# Parameter construction (deterministic, uniform in [-0.01, 0.01]).
# Weights are stored already transposed to (in_features, out_features),
# in the ORIGINAL (unfused) layout -- used by the pure-JAX reference.
# ----------------------------------------------------------------------------
def init_params(key, randomize=0.01):
    lb, ub = -randomize, randomize

    def uni(k, shape):
        return jax.random.uniform(k, shape, jnp.float32, lb, ub)

    keys = jax.random.split(key, 16)
    p = {}
    p["w_acc1"] = uni(keys[0], (ACC_INPUT_INDEX.shape[0], DIM_ACC_LAYER_1))
    p["b_acc1"] = uni(keys[1], (1, DIM_ACC_LAYER_1))
    p["w_sh1"] = uni(keys[2], (STEER_INPUT_INDEX.shape[0], DIM_STEER_LAYER_1_HEAD))
    p["b_sh1"] = uni(keys[3], (1, DIM_STEER_LAYER_1_HEAD))
    p["w_st1"] = uni(keys[4], (STEER_INPUT_INDEX_FULL.shape[0], DIM_STEER_LAYER_1_TAIL))
    p["b_st1"] = uni(keys[5], (1, DIM_STEER_LAYER_1_TAIL))
    p["w_acc2"] = uni(keys[6], (DIM_ACC_LAYER_1, DIM_ACC_LAYER_2))
    p["b_acc2"] = uni(keys[7], (1, DIM_ACC_LAYER_2))
    p["w_s2h"] = uni(keys[8], (DIM_STEER_LAYER_1_HEAD, DIM_STEER_LAYER_2))
    p["w_s2t"] = uni(keys[9], (DIM_STEER_LAYER_1_TAIL, DIM_STEER_LAYER_2))
    p["b_s2"] = uni(keys[10], (1, DIM_STEER_LAYER_2))
    k10 = jax.random.split(keys[11], 4)
    p["w_l0v"] = uni(k10[0], (1, H0))
    p["w_l0a"] = uni(k10[1], (DIM_ACC_LAYER_2, H0))
    p["w_l0s"] = uni(k10[2], (DIM_STEER_LAYER_2, H0))
    p["b_l0"] = uni(k10[3], (1, H0))
    p["w_l1"] = uni(keys[12], (H0, H1))
    p["b_l1"] = uni(keys[13], (1, H1))
    kf = jax.random.split(keys[14], 4)
    p["w_fp"] = uni(kf[0], (H1, OUT_DIM))
    p["w_fa"] = uni(kf[1], (DIM_ACC_LAYER_2, OUT_DIM))
    p["w_fs"] = uni(kf[2], (DIM_STEER_LAYER_2, OUT_DIM))
    p["b_f"] = uni(kf[3], (1, OUT_DIM))
    return p


# ----------------------------------------------------------------------------
# Pack/fuse parameters once on the host side:
#   * first-layer weights scattered onto raw-x columns with normalizers folded
#   * acc/steer layer-2 fused block-diagonally
#   * stack[0] weight (a2s2 part) and finalize weight (a2s2 part) fused
#     column-wise into one (24, 38) RHS so a2s2 hits the MXU only once
# Weights are cast to `compute_dtype` (bf16 MXU operands by default);
# biases and the vel row stay f32 (f32 accumulation + f32 epilogue).
# ----------------------------------------------------------------------------
def pack_params(p, compute_dtype=jnp.bfloat16):
    W1 = jnp.zeros((IN_FEATURES, D1), jnp.float32)
    W1 = W1.at[ACC_INPUT_INDEX, 0:DIM_ACC_LAYER_1].set(ACC_NORMALIZE * p["w_acc1"])
    W1 = W1.at[STEER_INPUT_INDEX,
               DIM_ACC_LAYER_1:DIM_ACC_LAYER_1 + DIM_STEER_LAYER_1_HEAD].set(
        STEER_NORMALIZE * p["w_sh1"])
    W1 = W1.at[STEER_INPUT_INDEX_FULL,
               DIM_ACC_LAYER_1 + DIM_STEER_LAYER_1_HEAD:D1].set(
        STEER_NORMALIZE * p["w_st1"])
    b1 = jnp.concatenate([p["b_acc1"], p["b_sh1"], p["b_st1"]], axis=1)

    W2 = jnp.zeros((D1, D2), jnp.float32)
    W2 = W2.at[0:DIM_ACC_LAYER_1, 0:DIM_ACC_LAYER_2].set(p["w_acc2"])
    W2 = W2.at[DIM_ACC_LAYER_1:DIM_ACC_LAYER_1 + DIM_STEER_LAYER_1_HEAD,
               DIM_ACC_LAYER_2:D2].set(p["w_s2h"])
    W2 = W2.at[DIM_ACC_LAYER_1 + DIM_STEER_LAYER_1_HEAD:D1,
               DIM_ACC_LAYER_2:D2].set(p["w_s2t"])
    b2 = jnp.concatenate([p["b_acc2"], p["b_s2"]], axis=1)

    wl0v = (VEL_NORMALIZE * p["w_l0v"]).astype(jnp.float32)      # stays f32 (VPU)
    Wl0 = jnp.concatenate([p["w_l0a"], p["w_l0s"]], axis=0)      # (24, 32)
    Wf = jnp.concatenate([p["w_fa"], p["w_fs"]], axis=0)         # (24, 6)
    Wl0f = jnp.concatenate([Wl0, Wf], axis=1)                    # (24, 38)

    cdt = compute_dtype
    return {
        "W1": W1.astype(cdt), "b1": b1,
        "W2": W2.astype(cdt), "b2": b2,
        "wl0v": wl0v,
        "Wl0f": Wl0f.astype(cdt), "bl0": p["b_l0"],
        "Wl1": p["w_l1"].astype(cdt), "bl1": p["b_l1"],
        "Wfp": p["w_fp"].astype(cdt), "bf": p["b_f"],
    }


_PARAM_ORDER = ("W1", "b1", "W2", "b2", "wl0v", "Wl0f", "bl0",
                "Wl1", "bl1", "Wfp", "bf")


# ----------------------------------------------------------------------------
# Wrapper: batch-gridded pallas_call with resident packed weights
# ----------------------------------------------------------------------------
def drive_nn_forward(x, packed, *, tile_b=8192):
    batch = x.shape[0]

    # Batch tile: multiple of 8 (sublane), capped at tile_b, but clamped so the
    # "parallel" grid keeps >= 2 steps when possible (v7x has 2 TensorCores).
    tb = min(tile_b, max(8, _round_up(pl.cdiv(batch, 2), 8)))
    grid = (pl.cdiv(batch, tb),)   # ragged last block handled by Pallas masking

    params = [packed[k] for k in _PARAM_ORDER]

    def resident(arr):
        # full-array block, constant block index -> fetched once, stays in VMEM
        return pl.BlockSpec(arr.shape, lambda i: (0,) * arr.ndim)

    return pl.pallas_call(
        _drive_nn_kernel,
        out_shape=jax.ShapeDtypeStruct((batch, OUT_DIM), jnp.float32),
        grid=grid,
        in_specs=[pl.BlockSpec((tb, IN_FEATURES), lambda i: (i, 0))]
                 + [resident(a) for a in params],
        out_specs=pl.BlockSpec((tb, OUT_DIM), lambda i: (i, 0)),
        compiler_params=pltpu.CompilerParams(
            dimension_semantics=("parallel",),
        ),
    )(x, *params)


# ----------------------------------------------------------------------------
# Pure-JAX reference (original, unfused network) for verification
# ----------------------------------------------------------------------------
def drive_nn_reference(x, p):
    x = x.astype(jnp.float32)
    relu = lambda v: jnp.maximum(v, 0.0)
    xa = ACC_NORMALIZE * x[:, ACC_INPUT_INDEX]
    xh = STEER_NORMALIZE * x[:, STEER_INPUT_INDEX]
    xt = STEER_NORMALIZE * x[:, STEER_INPUT_INDEX_FULL]
    xv = VEL_NORMALIZE * x[:, 0:1]

    acc1 = relu(xa @ p["w_acc1"] + p["b_acc1"])
    steer1 = jnp.concatenate(
        [relu(xh @ p["w_sh1"] + p["b_sh1"]), relu(xt @ p["w_st1"] + p["b_st1"])],
        axis=1,
    )
    acc2 = relu(acc1 @ p["w_acc2"] + p["b_acc2"])
    w_s2 = jnp.concatenate([p["w_s2h"], p["w_s2t"]], axis=0)
    steer2 = relu(steer1 @ w_s2 + p["b_s2"])
    w_l0 = jnp.concatenate([p["w_l0v"], p["w_l0a"], p["w_l0s"]], axis=0)
    cat0 = jnp.concatenate([xv, acc2, steer2], axis=1)
    h0 = relu(cat0 @ w_l0 + p["b_l0"])
    pre = relu(h0 @ p["w_l1"] + p["b_l1"])
    w_f = jnp.concatenate([p["w_fp"], p["w_fa"], p["w_fs"]], axis=0)
    catf = jnp.concatenate([pre, acc2, steer2], axis=1)
    return catf @ w_f + p["b_f"]


if __name__ == "__main__":
    key = jax.random.PRNGKey(0)
    k_param, k_x = jax.random.split(key)

    params = init_params(k_param, randomize=0.01)

    batch = 37  # deliberately not a multiple of 8/tile to exercise the ragged path
    x = jax.random.normal(k_x, (batch, IN_FEATURES), dtype=jnp.float32)
    ref = drive_nn_reference(x, params)

    # f32 MXU-operand path — strict tolerance
    packed_f32 = pack_params(params, jnp.float32)
    pred = jax.block_until_ready(drive_nn_forward(x, packed_f32))
    assert pred.shape == (batch, OUT_DIM)
    np.testing.assert_allclose(np.asarray(pred), np.asarray(ref), rtol=1e-5, atol=1e-6)

    # bf16 MXU-operand path (f32 accumulation / epilogue / vel) — looser tolerance
    packed_bf16 = pack_params(params, jnp.bfloat16)
    pred_bf16 = jax.block_until_ready(drive_nn_forward(x, packed_bf16))
    np.testing.assert_allclose(np.asarray(pred_bf16), np.asarray(ref),
                               rtol=5e-2, atol=1e-3)

    print("KERNEL_OK")
</pallas_src>

<mosaic_0001>
module attributes {stable_mosaic.version = 11 : i64} {
  func.func @_drive_nn_kernel(%arg0: i32, %arg1: memref<24x19xf32, #tpu.memory_space<vmem>>, %arg2: memref<19x64xf32, #tpu.memory_space<vmem>>, %arg3: memref<1x64xf32, #tpu.memory_space<vmem>>, %arg4: memref<64x24xf32, #tpu.memory_space<vmem>>, %arg5: memref<1x24xf32, #tpu.memory_space<vmem>>, %arg6: memref<1x32xf32, #tpu.memory_space<vmem>>, %arg7: memref<24x38xf32, #tpu.memory_space<vmem>>, %arg8: memref<1x32xf32, #tpu.memory_space<vmem>>, %arg9: memref<32x16xf32, #tpu.memory_space<vmem>>, %arg10: memref<1x16xf32, #tpu.memory_space<vmem>>, %arg11: memref<16x6xf32, #tpu.memory_space<vmem>>, %arg12: memref<1x6xf32, #tpu.memory_space<vmem>>, %arg13: memref<24x6xf32, #tpu.memory_space<vmem>>) attributes {dimension_semantics = [#tpu.dimension_semantics<parallel>], iteration_bounds = array<i64: 2>, scalar_prefetch = 0 : i64, scratch_operands = 0 : i64, tpu.core_type = #tpu.core_type<tc>, window_params = [{transform_indices = @transform_0, window_bounds = array<i64: 24, 19>}, {pipeline_mode = #tpu.pipeline_mode<synchronous>, transform_indices = @transform_1, window_bounds = array<i64: 19, 64>}, {pipeline_mode = #tpu.pipeline_mode<synchronous>, transform_indices = @transform_2, window_bounds = array<i64: 1, 64>}, {pipeline_mode = #tpu.pipeline_mode<synchronous>, transform_indices = @transform_3, window_bounds = array<i64: 64, 24>}, {pipeline_mode = #tpu.pipeline_mode<synchronous>, transform_indices = @transform_4, window_bounds = array<i64: 1, 24>}, {pipeline_mode = #tpu.pipeline_mode<synchronous>, transform_indices = @transform_5, window_bounds = array<i64: 1, 32>}, {pipeline_mode = #tpu.pipeline_mode<synchronous>, transform_indices = @transform_6, window_bounds = array<i64: 24, 38>}, {pipeline_mode = #tpu.pipeline_mode<synchronous>, transform_indices = @transform_7, window_bounds = array<i64: 1, 32>}, {pipeline_mode = #tpu.pipeline_mode<synchronous>, transform_indices = @transform_8, window_bounds = array<i64: 32, 16>}, {pipeline_mode = #tpu.pipeline_mode<synchronous>, transform_indices = @transform_9, window_bounds = array<i64: 1, 16>}, {pipeline_mode = #tpu.pipeline_mode<synchronous>, transform_indices = @transform_10, window_bounds = array<i64: 16, 6>}, {pipeline_mode = #tpu.pipeline_mode<synchronous>, transform_indices = @transform_11, window_bounds = array<i64: 1, 6>}, {transform_indices = @transform_12, window_bounds = array<i64: 24, 6>}]} {
    %c0 = arith.constant 0 : index
    %c0_0 = arith.constant 0 : index
    %0 = vector.load %arg1[%c0, %c0_0] : memref<24x19xf32, #tpu.memory_space<vmem>>, vector<24x19xf32>
    %c0_1 = arith.constant 0 : index
    %c0_2 = arith.constant 0 : index
    %1 = vector.load %arg2[%c0_1, %c0_2] : memref<19x64xf32, #tpu.memory_space<vmem>>, vector<19x64xf32>
    %cst = arith.constant dense<0.000000e+00> : vector<24x64xf32>
    %2 = tpu.matmul %0, %1, %cst {dimension_numbers = #tpu.dot_dimension_numbers<[1], [0], [0], [1], [0, 0, 1, 1], [], []>} : vector<24x19xf32>, vector<19x64xf32>, vector<24x64xf32> -> vector<24x64xf32>
    %c0_3 = arith.constant 0 : index
    %c0_4 = arith.constant 0 : index
    %3 = vector.load %arg3[%c0_3, %c0_4] : memref<1x64xf32, #tpu.memory_space<vmem>>, vector<1x64xf32>
    %4 = vector.broadcast %3 : vector<1x64xf32> to vector<24x64xf32>
    %5 = arith.addf %2, %4 : vector<24x64xf32>
    %cst_5 = arith.constant 0.000000e+00 : f32
    %6 = vector.broadcast %cst_5 : f32 to vector<24x64xf32>
    %7 = arith.maximumf %5, %6 : vector<24x64xf32>
    %c0_6 = arith.constant 0 : index
    %c0_7 = arith.constant 0 : index
    %8 = vector.load %arg4[%c0_6, %c0_7] : memref<64x24xf32, #tpu.memory_space<vmem>>, vector<64x24xf32>
    %cst_8 = arith.constant dense<0.000000e+00> : vector<24x24xf32>
    %9 = tpu.matmul %7, %8, %cst_8 {dimension_numbers = #tpu.dot_dimension_numbers<[1], [0], [0], [1], [0, 0, 1, 1], [], []>} : vector<24x64xf32>, vector<64x24xf32>, vector<24x24xf32> -> vector<24x24xf32>
    %c0_9 = arith.constant 0 : index
    %c0_10 = arith.constant 0 : index
    %10 = vector.load %arg5[%c0_9, %c0_10] : memref<1x24xf32, #tpu.memory_space<vmem>>, vector<1x24xf32>
    %11 = vector.broadcast %10 : vector<1x24xf32> to vector<24x24xf32>
    %12 = arith.addf %9, %11 : vector<24x24xf32>
    %cst_11 = arith.constant 0.000000e+00 : f32
    %13 = vector.broadcast %cst_11 : f32 to vector<24x24xf32>
    %14 = arith.maximumf %12, %13 : vector<24x24xf32>
    %c0_12 = arith.constant 0 : index
    %c0_13 = arith.constant 0 : index
    %15 = vector.load %arg7[%c0_12, %c0_13] : memref<24x38xf32, #tpu.memory_space<vmem>>, vector<24x38xf32>
    %cst_14 = arith.constant dense<0.000000e+00> : vector<24x38xf32>
    %16 = tpu.matmul %14, %15, %cst_14 {dimension_numbers = #tpu.dot_dimension_numbers<[1], [0], [0], [1], [0, 0, 1, 1], [], []>} : vector<24x24xf32>, vector<24x38xf32>, vector<24x38xf32> -> vector<24x38xf32>
    %17 = vector.extract_strided_slice %0 {offsets = [0, 0], sizes = [24, 1], strides = [1, 1]} : vector<24x19xf32> to vector<24x1xf32>
    %c0_15 = arith.constant 0 : index
    %c0_16 = arith.constant 0 : index
    %18 = vector.load %arg6[%c0_15, %c0_16] : memref<1x32xf32, #tpu.memory_space<vmem>>, vector<1x32xf32>
    %19 = vector.broadcast %17 : vector<24x1xf32> to vector<24x32xf32>
    %20 = vector.broadcast %18 : vector<1x32xf32> to vector<24x32xf32>
    %21 = arith.mulf %19, %20 : vector<24x32xf32>
    %22 = vector.extract_strided_slice %16 {offsets = [0, 0], sizes = [24, 32], strides = [1, 1]} : vector<24x38xf32> to vector<24x32xf32>
    %23 = arith.addf %21, %22 : vector<24x32xf32>
    %c0_17 = arith.constant 0 : index
    %c0_18 = arith.constant 0 : index
    %24 = vector.load %arg8[%c0_17, %c0_18] : memref<1x32xf32, #tpu.memory_space<vmem>>, vector<1x32xf32>
    %25 = vector.broadcast %24 : vector<1x32xf32> to vector<24x32xf32>
    %26 = arith.addf %23, %25 : vector<24x32xf32>
    %cst_19 = arith.constant 0.000000e+00 : f32
    %27 = vector.broadcast %cst_19 : f32 to vector<24x32xf32>
    %28 = arith.maximumf %26, %27 : vector<24x32xf32>
    %c0_20 = arith.constant 0 : index
    %c0_21 = arith.constant 0 : index
    %29 = vector.load %arg9[%c0_20, %c0_21] : memref<32x16xf32, #tpu.memory_space<vmem>>, vector<32x16xf32>
    %cst_22 = arith.constant dense<0.000000e+00> : vector<24x16xf32>
    %30 = tpu.matmul %28, %29, %cst_22 {dimension_numbers = #tpu.dot_dimension_numbers<[1], [0], [0], [1], [0, 0, 1, 1], [], []>} : vector<24x32xf32>, vector<32x16xf32>, vector<24x16xf32> -> vector<24x16xf32>
    %c0_23 = arith.constant 0 : index
    %c0_24 = arith.constant 0 : index
    %31 = vector.load %arg10[%c0_23, %c0_24] : memref<1x16xf32, #tpu.memory_space<vmem>>, vector<1x16xf32>
    %32 = vector.broadcast %31 : vector<1x16xf32> to vector<24x16xf32>
    %33 = arith.addf %30, %32 : vector<24x16xf32>
    %cst_25 = arith.constant 0.000000e+00 : f32
    %34 = vector.broadcast %cst_25 : f32 to vector<24x16xf32>
    %35 = arith.maximumf %33, %34 : vector<24x16xf32>
    %c0_26 = arith.constant 0 : index
    %c0_27 = arith.constant 0 : index
    %36 = vector.load %arg11[%c0_26, %c0_27] : memref<16x6xf32, #tpu.memory_space<vmem>>, vector<16x6xf32>
    %cst_28 = arith.constant dense<0.000000e+00> : vector<24x6xf32>
    %37 = tpu.matmul %35, %36, %cst_28 {dimension_numbers = #tpu.dot_dimension_numbers<[1], [0], [0], [1], [0, 0, 1, 1], [], []>} : vector<24x16xf32>, vector<16x6xf32>, vector<24x6xf32> -> vector<24x6xf32>
    %38 = vector.extract_strided_slice %16 {offsets = [0, 32], sizes = [24, 6], strides = [1, 1]} : vector<24x38xf32> to vector<24x6xf32>
    %39 = arith.addf %37, %38 : vector<24x6xf32>
    %c0_29 = arith.constant 0 : index
    %c0_30 = arith.constant 0 : index
    %40 = vector.load %arg12[%c0_29, %c0_30] : memref<1x6xf32, #tpu.memory_space<vmem>>, vector<1x6xf32>
    %41 = vector.broadcast %40 : vector<1x6xf32> to vector<24x6xf32>
    %42 = arith.addf %39, %41 : vector<24x6xf32>
    %c0_31 = arith.constant 0 : index
    %c0_32 = arith.constant 0 : index
    %43 = vector.load %arg13[%c0_31, %c0_32] : memref<24x6xf32, #tpu.memory_space<vmem>>, vector<24x6xf32>
    tpu.vector_store %arg13[%c0_31, %c0_32], %42 {strides = array<i32>} : memref<24x6xf32, #tpu.memory_space<vmem>>, vector<24x6xf32>,
    return
  }
  func.func @transform_0(%arg0: i32) -> (i32, i32) {
    %c0_i32 = arith.constant 0 : i32
    %c0_i32_0 = arith.constant 0 : i32
    return %arg0, %c0_i32 : i32, i32
  }
  func.func @transform_1(%arg0: i32) -> (i32, i32) {
    %c0_i32 = arith.constant 0 : i32
    %c0_i32_0 = arith.constant 0 : i32
    %c0_i32_1 = arith.constant 0 : i32
    return %c0_i32, %c0_i32_0 : i32, i32
  }
  func.func @transform_2(%arg0: i32) -> (i32, i32) {
    %c0_i32 = arith.constant 0 : i32
    %c0_i32_0 = arith.constant 0 : i32
    %c0_i32_1 = arith.constant 0 : i32
    return %c0_i32, %c0_i32_0 : i32, i32
  }
  func.func @transform_3(%arg0: i32) -> (i32, i32) {
    %c0_i32 = arith.constant 0 : i32
    %c0_i32_0 = arith.constant 0 : i32
    %c0_i32_1 = arith.constant 0 : i32
    return %c0_i32, %c0_i32_0 : i32, i32
  }
  func.func @transform_4(%arg0: i32) -> (i32, i32) {
    %c0_i32 = arith.constant 0 : i32
    %c0_i32_0 = arith.constant 0 : i32
    %c0_i32_1 = arith.constant 0 : i32
    return %c0_i32, %c0_i32_0 : i32, i32
  }
  func.func @transform_5(%arg0: i32) -> (i32, i32) {
    %c0_i32 = arith.constant 0 : i32
    %c0_i32_0 = arith.constant 0 : i32
    %c0_i32_1 = arith.constant 0 : i32
    return %c0_i32, %c0_i32_0 : i32, i32
  }
  func.func @transform_6(%arg0: i32) -> (i32, i32) {
    %c0_i32 = arith.constant 0 : i32
    %c0_i32_0 = arith.constant 0 : i32
    %c0_i32_1 = arith.constant 0 : i32
    return %c0_i32, %c0_i32_0 : i32, i32
  }
  func.func @transform_7(%arg0: i32) -> (i32, i32) {
    %c0_i32 = arith.constant 0 : i32
    %c0_i32_0 = arith.constant 0 : i32
    %c0_i32_1 = arith.constant 0 : i32
    return %c0_i32, %c0_i32_0 : i32, i32
  }
  func.func @transform_8(%arg0: i32) -> (i32, i32) {
    %c0_i32 = arith.constant 0 : i32
    %c0_i32_0 = arith.constant 0 : i32
    %c0_i32_1 = arith.constant 0 : i32
    return %c0_i32, %c0_i32_0 : i32, i32
  }
  func.func @transform_9(%arg0: i32) -> (i32, i32) {
    %c0_i32 = arith.constant 0 : i32
    %c0_i32_0 = arith.constant 0 : i32
    %c0_i32_1 = arith.constant 0 : i32
    return %c0_i32, %c0_i32_0 : i32, i32
  }
  func.func @transform_10(%arg0: i32) -> (i32, i32) {
    %c0_i32 = arith.constant 0 : i32
    %c0_i32_0 = arith.constant 0 : i32
    %c0_i32_1 = arith.constant 0 : i32
    return %c0_i32, %c0_i32_0 : i32, i32
  }
  func.func @transform_11(%arg0: i32) -> (i32, i32) {
    %c0_i32 = arith.constant 0 : i32
    %c0_i32_0 = arith.constant 0 : i32
    %c0_i32_1 = arith.constant 0 : i32
    return %c0_i32, %c0_i32_0 : i32, i32
  }
  func.func @transform_12(%arg0: i32) -> (i32, i32) {
    %c0_i32 = arith.constant 0 : i32
    %c0_i32_0 = arith.constant 0 : i32
    return %arg0, %c0_i32 : i32, i32
  }
}

</mosaic_0001>

<llo_original>
// kernel: tpu_custom_call.1
$region0: #{tpu_custom_call.1}
  #allocation0 [shape = 'u32[]', space=smem, size = 0x4, offset = 0x4, fixed_abs, tag = 'smem constant byte address 0x4 - core index']
  #allocation1 [shape = 'u32[144,128]{1,0:T(1,128)}', space=vmem, size = 0x12000, scoped, tag = 'internal scratch']
  %s0 = inlined_call_operand.vmem [shape: f32[37,19], index: 0, kind: input, shape index: {}]
  %s1 = inlined_call_operand.vmem [shape: f32[19,64], index: 1, kind: input, shape index: {}]
  %s2 = inlined_call_operand.vmem [shape: f32[1,64], index: 2, kind: input, shape index: {}]
  %s3 = inlined_call_operand.vmem [shape: f32[64,24], index: 3, kind: input, shape index: {}]
  %s4 = inlined_call_operand.vmem [shape: f32[1,24], index: 4, kind: input, shape index: {}]
  %s5 = inlined_call_operand.vmem [shape: f32[1,32], index: 5, kind: input, shape index: {}]
  %s6 = inlined_call_operand.vmem [shape: f32[24,38], index: 6, kind: input, shape index: {}]
  %s7 = inlined_call_operand.vmem [shape: f32[1,32], index: 7, kind: input, shape index: {}]
  %s8 = inlined_call_operand.vmem [shape: f32[32,16], index: 8, kind: input, shape index: {}]
  %s9 = inlined_call_operand.vmem [shape: f32[1,16], index: 9, kind: input, shape index: {}]
  %s10 = inlined_call_operand.vmem [shape: f32[16,6], index: 10, kind: input, shape index: {}]
  %s11 = inlined_call_operand.vmem [shape: f32[1,6], index: 11, kind: input, shape index: {}]
  %s12 = inlined_call_operand.vmem [shape: f32[37,6], index: 12, kind: output, shape index: {}]
  %s13 = sld [smem:[#allocation0]]
  $region129: #{tpu_custom_call.1} parent=0
    _
  %s15 = ssub.s32 1, %s13
  %s16 = scalar_select 0, %s15, %s13
  $region1: #{tpu_custom_call.1} parent=0
    #allocation2 [shape = 'u8[24576]{0}', space=vmem, size = 0x6000, scoped, tag = 'output window, operand 0']
    loop: start=0, step=1, limit=4
    $region2: #{tpu_custom_call.1} parent=1 // loop_pre_header
      _
    $region3: #{tpu_custom_call.1} parent=1 // loop_header
      %s18 = sphi 0, %s22
      %p19 = scmp.ge.s32.totalorder %s18, 4
      %s28 = sphi 0, %s30
      %s31 = sphi 0, %s28
      %s32 = sphi 0, %s31
      %s48 = sphi 0, %s32
      %s52 = sphi 0, %s52
      %s54 = sphi 0, %s52
      %s55 = sphi 0, %s54
      %s69 = sphi 0, %s55
      %s73 = sphi 0, %s73
      %s75 = sphi 0, %s73
      %s76 = sphi 0, %s75
      %s90 = sphi 0, %s76
      %s94 = sphi 0, %s94
      %s96 = sphi 0, %s94
      %s97 = sphi 0, %s96
      %s111 = sphi 0, %s97
      %s115 = sphi 0, %s115
      %s117 = sphi 0, %s115
      %s118 = sphi 0, %s117
      %s132 = sphi 0, %s118
      %s136 = sphi 0, %s136
      %s138 = sphi 0, %s136
      %s139 = sphi 0, %s138
      %s153 = sphi 0, %s139
      %s157 = sphi 0, %s157
      %s159 = sphi 0, %s157
      %s160 = sphi 0, %s159
      %s174 = sphi 0, %s160
      %s178 = sphi 0, %s178
      %s180 = sphi 0, %s178
      %s181 = sphi 0, %s180
      %s195 = sphi 0, %s181
      %s199 = sphi 0, %s199
      %s201 = sphi 0, %s199
      %s202 = sphi 0, %s201
      %s216 = sphi 0, %s202
      %s220 = sphi 0, %s220
      %s222 = sphi 0, %s220
      %s223 = sphi 0, %s222
      %s237 = sphi 0, %s223
      %s241 = sphi 0, %s241
      %s243 = sphi 0, %s241
      %s244 = sphi 0, %s243
      %s258 = sphi 0, %s244
      %s262 = sphi 0, %s262
      %s264 = sphi 0, %s262
      %s265 = sphi 0, %s264
      %s279 = sphi 0, %s265
      %s285 = sphi 0, %s287
      %s288 = sphi 0, %s285
      %s289 = sphi 0, %s288
      %s305 = sphi 0, %s289
    $region4: #{tpu_custom_call.1} parent=1 // loop_header_branch
      %21 = sbr.rel (%p19) target = $region8
    $region5: #{tpu_custom_call.1} parent=1 // loop_body
      %s23 = ssub.s32 %s18, 1
      %s24 = ssub.s32 %s18, 2
      %s25 = sadd.s32 %s18, 1
      %s26 = ssub.s32 %s18, %s25
      %p27 = scmp.eq.s32.totalorder %s26, 0
      %s29 = sadd.s32 %s28, 1
      %s30 = scalar_select %p27, %s28, %s29
      %p33 = pneg %p27
      %p34 = scmp.eq.s32.totalorder %s18, 1
      %p35 = por %p33, %p34
      %p36 = scmp.ne.s32.totalorder %s28, %s31
      %p37 = scmp.eq.s32.totalorder %s18, 0
      %p38 = por %p36, %p37
      %p39 = scmp.ne.s32.totalorder %s28, %s31
      %p40 = scmp.eq.s32.totalorder %s23, 1
      %p41 = por %p39, %p40
      %p42 = scmp.ne.s32.totalorder %s31, %s32
      %p43 = scmp.eq.s32.totalorder %s23, 0
      %p44 = por %p42, %p43
      %p45 = scmp.ne.s32.totalorder %s31, %s32
      %p46 = scmp.eq.s32.totalorder %s24, 1
      %p47 = por %p45, %p46
      %p49 = scmp.ne.s32.totalorder %s32, %s48
      %p50 = scmp.eq.s32.totalorder %s24, 0
      %p51 = por %p49, %p50
      %s53 = sadd.s32 %s52, 1
      %p56 = scmp.eq.s32.totalorder %s18, 1
      %p57 = scmp.ne.s32.totalorder %s52, %s54
      %p58 = scmp.eq.s32.totalorder %s18, 0
      %p59 = por %p57, %p58
      %p60 = scmp.ne.s32.totalorder %s52, %s54
      %p61 = scmp.eq.s32.totalorder %s23, 1
      %p62 = por %p60, %p61
      %p63 = scmp.ne.s32.totalorder %s54, %s55
      %p64 = scmp.eq.s32.totalorder %s23, 0
      %p65 = por %p63, %p64
      %p66 = scmp.ne.s32.totalorder %s54, %s55
      %p67 = scmp.eq.s32.totalorder %s24, 1
      %p68 = por %p66, %p67
      %p70 = scmp.ne.s32.totalorder %s55, %s69
      %p71 = scmp.eq.s32.totalorder %s24, 0
      %p72 = por %p70, %p71
      %s74 = sadd.s32 %s73, 1
      %p77 = scmp.eq.s32.totalorder %s18, 1
      %p78 = scmp.ne.s32.totalorder %s73, %s75
      %p79 = scmp.eq.s32.totalorder %s18, 0
      %p80 = por %p78, %p79
      %p81 = scmp.ne.s32.totalorder %s73, %s75
      %p82 = scmp.eq.s32.totalorder %s23, 1
      %p83 = por %p81, %p82
      %p84 = scmp.ne.s32.totalorder %s75, %s76
      %p85 = scmp.eq.s32.totalorder %s23, 0
      %p86 = por %p84, %p85
      %p87 = scmp.ne.s32.totalorder %s75, %s76
      %p88 = scmp.eq.s32.totalorder %s24, 1
      %p89 = por %p87, %p88
      %p91 = scmp.ne.s32.totalorder %s76, %s90
      %p92 = scmp.eq.s32.totalorder %s24, 0
      %p93 = por %p91, %p92
      %s95 = sadd.s32 %s94, 1
      %p98 = scmp.eq.s32.totalorder %s18, 1
      %p99 = scmp.ne.s32.totalorder %s94, %s96
      %p100 = scmp.eq.s32.totalorder %s18, 0
      %p101 = por %p99, %p100
      %p102 = scmp.ne.s32.totalorder %s94, %s96
      %p103 = scmp.eq.s32.totalorder %s23, 1
      %p104 = por %p102, %p103
      %p105 = scmp.ne.s32.totalorder %s96, %s97
      %p106 = scmp.eq.s32.totalorder %s23, 0
      %p107 = por %p105, %p106
      %p108 = scmp.ne.s32.totalorder %s96, %s97
      %p109 = scmp.eq.s32.totalorder %s24, 1
      %p110 = por %p108, %p109
      %p112 = scmp.ne.s32.totalorder %s97, %s111
      %p113 = scmp.eq.s32.totalorder %s24, 0
      %p114 = por %p112, %p113
      %s116 = sadd.s32 %s115, 1
      %p119 = scmp.eq.s32.totalorder %s18, 1
      %p120 = scmp.ne.s32.totalorder %s115, %s117
      %p121 = scmp.eq.s32.totalorder %s18, 0
      %p122 = por %p120, %p121
      %p123 = scmp.ne.s32.totalorder %s115, %s117
      %p124 = scmp.eq.s32.totalorder %s23, 1
      %p125 = por %p123, %p124
      %p126 = scmp.ne.s32.totalorder %s117, %s118
      %p127 = scmp.eq.s32.totalorder %s23, 0
      %p128 = por %p126, %p127
      %p129 = scmp.ne.s32.totalorder %s117, %s118
      %p130 = scmp.eq.s32.totalorder %s24, 1
      %p131 = por %p129, %p130
      %p133 = scmp.ne.s32.totalorder %s118, %s132
      %p134 = scmp.eq.s32.totalorder %s24, 0
      %p135 = por %p133, %p134
      %s137 = sadd.s32 %s136, 1
      %p140 = scmp.eq.s32.totalorder %s18, 1
      %p141 = scmp.ne.s32.totalorder %s136, %s138
      %p142 = scmp.eq.s32.totalorder %s18, 0
      %p143 = por %p141, %p142
      %p144 = scmp.ne.s32.totalorder %s136, %s138
      %p145 = scmp.eq.s32.totalorder %s23, 1
      %p146 = por %p144, %p145
      %p147 = scmp.ne.s32.totalorder %s138, %s139
      %p148 = scmp.eq.s32.totalorder %s23, 0
      %p149 = por %p147, %p148
      %p150 = scmp.ne.s32.totalorder %s138, %s139
      %p151 = scmp.eq.s32.totalorder %s24, 1
      %p152 = por %p150, %p151
      %p154 = scmp.ne.s32.totalorder %s139, %s153
      %p155 = scmp.eq.s32.totalorder %s24, 0
      %p156 = por %p154, %p155
      %s158 = sadd.s32 %s157, 1
      %p161 = scmp.eq.s32.totalorder %s18, 1
      %p162 = scmp.ne.s32.totalorder %s157, %s159
      %p163 = scmp.eq.s32.totalorder %s18, 0
      %p164 = por %p162, %p163
      %p165 = scmp.ne.s32.totalorder %s157, %s159
      %p166 = scmp.eq.s32.totalorder %s23, 1
      %p167 = por %p165, %p166
      %p168 = scmp.ne.s32.totalorder %s159, %s160
      %p169 = scmp.eq.s32.totalorder %s23, 0
      %p170 = por %p168, %p169
      %p171 = scmp.ne.s32.totalorder %s159, %s160
      %p172 = scmp.eq.s32.totalorder %s24, 1
      %p173 = por %p171, %p172
      %p175 = scmp.ne.s32.totalorder %s160, %s174
      %p176 = scmp.eq.s32.totalorder %s24, 0
      %p177 = por %p175, %p176
      %s179 = sadd.s32 %s178, 1
      %p182 = scmp.eq.s32.totalorder %s18, 1
      %p183 = scmp.ne.s32.totalorder %s178, %s180
      %p184 = scmp.eq.s32.totalorder %s18, 0
      %p185 = por %p183, %p184
      %p186 = scmp.ne.s32.totalorder %s178, %s180
      %p187 = scmp.eq.s32.totalorder %s23, 1
      %p188 = por %p186, %p187
      %p189 = scmp.ne.s32.totalorder %s180, %s181
      %p190 = scmp.eq.s32.totalorder %s23, 0
      %p191 = por %p189, %p190
      %p192 = scmp.ne.s32.totalorder %s180, %s181
      %p193 = scmp.eq.s32.totalorder %s24, 1
      %p194 = por %p192, %p193
      %p196 = scmp.ne.s32.totalorder %s181, %s195
      %p197 = scmp.eq.s32.totalorder %s24, 0
      %p198 = por %p196, %p197
      %s200 = sadd.s32 %s199, 1
      %p203 = scmp.eq.s32.totalorder %s18, 1
      %p204 = scmp.ne.s32.totalorder %s199, %s201
      %p205 = scmp.eq.s32.totalorder %s18, 0
      %p206 = por %p204, %p205
      %p207 = scmp.ne.s32.totalorder %s199, %s201
      %p208 = scmp.eq.s32.totalorder %s23, 1
      %p209 = por %p207, %p208
      %p210 = scmp.ne.s32.totalorder %s201, %s202
      %p211 = scmp.eq.s32.totalorder %s23, 0
      %p212 = por %p210, %p211
      %p213 = scmp.ne.s32.totalorder %s201, %s202
      %p214 = scmp.eq.s32.totalorder %s24, 1
      %p215 = por %p213, %p214
      %p217 = scmp.ne.s32.totalorder %s202, %s216
      %p218 = scmp.eq.s32.totalorder %s24, 0
      %p219 = por %p217, %p218
      %s221 = sadd.s32 %s220, 1
      %p224 = scmp.eq.s32.totalorder %s18, 1
      %p225 = scmp.ne.s32.totalorder %s220, %s222
      %p226 = scmp.eq.s32.totalorder %s18, 0
      %p227 = por %p225, %p226
      %p228 = scmp.ne.s32.totalorder %s220, %s222
      %p229 = scmp.eq.s32.totalorder %s23, 1
      %p230 = por %p228, %p229
      %p231 = scmp.ne.s32.totalorder %s222, %s223
      %p232 = scmp.eq.s32.totalorder %s23, 0
      %p233 = por %p231, %p232
      %p234 = scmp.ne.s32.totalorder %s222, %s223
      %p235 = scmp.eq.s32.totalorder %s24, 1
      %p236 = por %p234, %p235
      %p238 = scmp.ne.s32.totalorder %s223, %s237
      %p239 = scmp.eq.s32.totalorder %s24, 0
      %p240 = por %p238, %p239
      %s242 = sadd.s32 %s241, 1
      %p245 = scmp.eq.s32.totalorder %s18, 1
      %p246 = scmp.ne.s32.totalorder %s241, %s243
      %p247 = scmp.eq.s32.totalorder %s18, 0
      %p248 = por %p246, %p247
      %p249 = scmp.ne.s32.totalorder %s241, %s243
      %p250 = scmp.eq.s32.totalorder %s23, 1
      %p251 = por %p249, %p250
      %p252 = scmp.ne.s32.totalorder %s243, %s244
      %p253 = scmp.eq.s32.totalorder %s23, 0
      %p254 = por %p252, %p253
      %p255 = scmp.ne.s32.totalorder %s243, %s244
      %p256 = scmp.eq.s32.totalorder %s24, 1
      %p257 = por %p255, %p256
      %p259 = scmp.ne.s32.totalorder %s244, %s258
      %p260 = scmp.eq.s32.totalorder %s24, 0
      %p261 = por %p259, %p260
      %s263 = sadd.s32 %s262, 1
      %p266 = scmp.eq.s32.totalorder %s18, 1
      %p267 = scmp.ne.s32.totalorder %s262, %s264
      %p268 = scmp.eq.s32.totalorder %s18, 0
      %p269 = por %p267, %p268
      %p270 = scmp.ne.s32.totalorder %s262, %s264
      %p271 = scmp.eq.s32.totalorder %s23, 1
      %p272 = por %p270, %p271
      %p273 = scmp.ne.s32.totalorder %s264, %s265
      %p274 = scmp.eq.s32.totalorder %s23, 0
      %p275 = por %p273, %p274
      %p276 = scmp.ne.s32.totalorder %s264, %s265
      %p277 = scmp.eq.s32.totalorder %s24, 1
      %p278 = por %p276, %p277
      %p280 = scmp.ne.s32.totalorder %s265, %s279
      %p281 = scmp.eq.s32.totalorder %s24, 0
      %p282 = por %p280, %p281
      %s283 = ssub.s32 %s18, %s25
      %p284 = scmp.eq.s32.totalorder %s283, 0
      %s286 = sadd.s32 %s285, 1
      %s287 = scalar_select %p284, %s285, %s286
      %p290 = pneg %p284
      %p291 = scmp.eq.s32.totalorder %s18, 1
      %p292 = por %p290, %p291
      %p293 = scmp.ne.s32.totalorder %s285, %s288
      %p294 = scmp.eq.s32.totalorder %s18, 0
      %p295 = por %p293, %p294
      %p296 = scmp.ne.s32.totalorder %s285, %s288
      %p297 = scmp.eq.s32.totalorder %s23, 1
      %p298 = por %p296, %p297
      %p299 = scmp.ne.s32.totalorder %s288, %s289
      %p300 = scmp.eq.s32.totalorder %s23, 0
      %p301 = por %p299, %p300
      %p302 = scmp.ne.s32.totalorder %s288, %s289
      %p303 = scmp.eq.s32.totalorder %s24, 1
      %p304 = por %p302, %p303
      %p306 = scmp.ne.s32.totalorder %s289, %s305
      %p307 = scmp.eq.s32.totalorder %s24, 0
      %p308 = por %p306, %p307
      %p309 = scmp.le.s32.totalorder 1, %s18
      %p310 = scmp.lt.s32.totalorder %s18, 3
      %p311 = pnand %p309, %p310
      %p312 = pneg %p311
      // Predicated region
      $region9: #{tpu_custom_call.1} parent=5 // pred_check
        _
      $region10: #{tpu_custom_call.1} parent=5 // pred_check_branch
        %314 = sbr.rel (%p311) target = $region12
      $region11: #{tpu_custom_call.1} parent=5 // pred_region
        %s315 = ssub.s32 %s18, 1
        // Predicated region
        $region13: #{tpu_custom_call.1} parent=11 // pred_check
          %p316 = pneg %p65
        $region14: #{tpu_custom_call.1} parent=11 // pred_check_branch
          %318 = sbr.rel (%p316) target = $region16
        $region15: #{tpu_custom_call.1} parent=11 // pred_region
          _
        $region16: #{tpu_custom_call.1} parent=11 // pred_fallthru
          _
        // Predicated region
        $region17: #{tpu_custom_call.1} parent=11 // pred_check
          %p319 = pneg %p86
        $region18: #{tpu_custom_call.1} parent=11 // pred_check_branch
          %321 = sbr.rel (%p319) target = $region20
        $region19: #{tpu_custom_call.1} parent=11 // pred_region
          _
        $region20: #{tpu_custom_call.1} parent=11 // pred_fallthru
          _
        // Predicated region
        $region21: #{tpu_custom_call.1} parent=11 // pred_check
          %p322 = pneg %p107
        $region22: #{tpu_custom_call.1} parent=11 // pred_check_branch
          %324 = sbr.rel (%p322) target = $region24
        $region23: #{tpu_custom_call.1} parent=11 // pred_region
          _
        $region24: #{tpu_custom_call.1} parent=11 // pred_fallthru
          _
        // Predicated region
        $region25: #{tpu_custom_call.1} parent=11 // pred_check
          %p325 = pneg %p128
        $region26: #{tpu_custom_call.1} parent=11 // pred_check_branch
          %327 = sbr.rel (%p325) target = $region28
        $region27: #{tpu_custom_call.1} parent=11 // pred_region
          _
        $region28: #{tpu_custom_call.1} parent=11 // pred_fallthru
          _
        // Predicated region
        $region29: #{tpu_custom_call.1} parent=11 // pred_check
          %p328 = pneg %p149
        $region30: #{tpu_custom_call.1} parent=11 // pred_check_branch
          %330 = sbr.rel (%p328) target = $region32
        $region31: #{tpu_custom_call.1} parent=11 // pred_region
          _
        $region32: #{tpu_custom_call.1} parent=11 // pred_fallthru
          _
        // Predicated region
        $region33: #{tpu_custom_call.1} parent=11 // pred_check
          %p331 = pneg %p170
        $region34: #{tpu_custom_call.1} parent=11 // pred_check_branch
          %333 = sbr.rel (%p331) target = $region36
        $region35: #{tpu_custom_call.1} parent=11 // pred_region
          _
        $region36: #{tpu_custom_call.1} parent=11 // pred_fallthru
          _
        // Predicated region
        $region37: #{tpu_custom_call.1} parent=11 // pred_check
          %p334 = pneg %p191
        $region38: #{tpu_custom_call.1} parent=11 // pred_check_branch
          %336 = sbr.rel (%p334) target = $region40
        $region39: #{tpu_custom_call.1} parent=11 // pred_region
          _
        $region40: #{tpu_custom_call.1} parent=11 // pred_fallthru
          _
        // Predicated region
        $region41: #{tpu_custom_call.1} parent=11 // pred_check
          %p337 = pneg %p212
        $region42: #{tpu_custom_call.1} parent=11 // pred_check_branch
          %339 = sbr.rel (%p337) target = $region44
        $region43: #{tpu_custom_call.1} parent=11 // pred_region
          _
        $region44: #{tpu_custom_call.1} parent=11 // pred_fallthru
          _
        // Predicated region
        $region45: #{tpu_custom_call.1} parent=11 // pred_check
          %p340 = pneg %p233
        $region46: #{tpu_custom_call.1} parent=11 // pred_check_branch
          %342 = sbr.rel (%p340) target = $region48
        $region47: #{tpu_custom_call.1} parent=11 // pred_region
          _
        $region48: #{tpu_custom_call.1} parent=11 // pred_fallthru
          _
        // Predicated region
        $region49: #{tpu_custom_call.1} parent=11 // pred_check
          %p343 = pneg %p254
        $region50: #{tpu_custom_call.1} parent=11 // pred_check_branch
          %345 = sbr.rel (%p343) target = $region52
        $region51: #{tpu_custom_call.1} parent=11 // pred_region
          _
        $region52: #{tpu_custom_call.1} parent=11 // pred_fallthru
          _
        // Predicated region
        $region53: #{tpu_custom_call.1} parent=11 // pred_check
          %p346 = pneg %p275
        $region54: #{tpu_custom_call.1} parent=11 // pred_check_branch
          %348 = sbr.rel (%p346) target = $region56
        $region55: #{tpu_custom_call.1} parent=11 // pred_region
          _
        $region56: #{tpu_custom_call.1} parent=11 // pred_fallthru
          _
      $region12: #{tpu_custom_call.1} parent=5 // pred_fallthru
        _
      %p349 = scmp.lt.s32.totalorder %s18, 2
      // Predicated region
      $region57: #{tpu_custom_call.1} parent=5 // pred_check
        %p350 = pneg %p349
      $region58: #{tpu_custom_call.1} parent=5 // pred_check_branch
        %352 = sbr.rel (%p350) target = $region60
      $region59: #{tpu_custom_call.1} parent=5 // pred_region
        // Predicated region
        $region61: #{tpu_custom_call.1} parent=59 // pred_check
          %p353 = pneg %p38
        $region62: #{tpu_custom_call.1} parent=59 // pred_check_branch
          %355 = sbr.rel (%p353) target = $region64
        $region63: #{tpu_custom_call.1} parent=59 // pred_region
          %s356 = smul.u32 3, %s18
          %s357 = ssub.s32 5, %s356
          %p358 = scmp.lt.s32.totalorder %s357, 3
          %s359 = scalar_select %p358, %s357, 3
          %s360 = smul.u32 128, %s359
          %p361 = scmp.lt.s32.totalorder %s356, 4
          %s362 = scalar_select %p361, %s356, 4
          %s363 = smul.addr %s362, 8
          %s364 = scalar_lea.vmem %s0, %s363
          %s365 = smul.u32 3, %s18
          %s366 = ssub.s32 5, %s365
          %p367 = scmp.lt.s32.totalorder %s366, 3
          %s368 = scalar_select %p367, %s366, 3
          %s369 = smul.u32 128, %s368
        $region64: #{tpu_custom_call.1} parent=59 // pred_fallthru
          _
      $region60: #{tpu_custom_call.1} parent=5 // pred_fallthru
        _
      %p370 = scmp.le.s32.totalorder 1, %s18
      %p371 = scmp.lt.s32.totalorder %s18, 3
      %p372 = pnand %p370, %p371
      %p373 = pneg %p372
      // Predicated region
      $region65: #{tpu_custom_call.1} parent=5 // pred_check
        _
      $region66: #{tpu_custom_call.1} parent=5 // pred_check_branch
        %375 = sbr.rel (%p372) target = $region68
      $region67: #{tpu_custom_call.1} parent=5 // pred_region
        %s376 = ssub.s32 %s18, 1
        %s377 = smul.u32 3, %s23
        %s378 = ssub.s32 5, %s377
        %p379 = scmp.lt.s32.totalorder %s378, 3
        %s380 = scalar_select %p379, %s378, 3
        %s381 = smul.u32 128, %s380
        %p382 = scmp.lt.s32.totalorder %s377, 4
        %s383 = scalar_select %p382, %s377, 4
        %s384 = smul.addr %s383, 8
        %s385 = scalar_lea.vmem %s0, %s384
        %p386 = pneg %p44
        %p387 = pneg %p41
        %p388 = pneg %p65
        %p389 = pneg %p62
        %p390 = pneg %p86
        %p391 = pneg %p83
        %p392 = pneg %p107
        %p393 = pneg %p104
        %p394 = pneg %p128
        %p395 = pneg %p125
        %p396 = pneg %p149
        %p397 = pneg %p146
        %p398 = pneg %p170
        %p399 = pneg %p167
        %p400 = pneg %p191
        %p401 = pneg %p188
        %p402 = pneg %p212
        %p403 = pneg %p209
        %p404 = pneg %p233
        %p405 = pneg %p230
        %p406 = pneg %p254
        %p407 = pneg %p251
        %p408 = pneg %p275
        %p409 = pneg %p272
        %p410 = pneg %p301
        %p411 = pneg %p298
        %s412 = sand.u32 %s288, 1
        %s413 = sand.u32 %s288, 1
        %s414 = smul.addr %s413, 24
        %s415 = scalar_lea.vmem [#allocation2], %s414
        %s416 = smul.u32 3, %s23
        %s417 = ssub.s32 5, %s416
        %p418 = scmp.lt.s32.totalorder %s417, 3
        %s419 = scalar_select %p418, %s417, 3
        %s420 = smul.u32 128, %s419
        %p421 = scmp.lt.s32.totalorder %s416, 4
        %s422 = scalar_select %p421, %s416, 4
        %s423 = smul.addr %s422, 8
        %s424 = scalar_lea.vmem %s0, %s423
        %s425 = smul.u32 3, %s23
        %s426 = ssub.s32 5, %s425
        %p427 = scmp.lt.s32.totalorder %s426, 3
        %s428 = scalar_select %p427, %s426, 3
        %s429 = smul.u32 128, %s428
        %s430 = smul.u32 3, %s23
        %s431 = ssub.s32 5, %s430
        %p432 = scmp.lt.s32.totalorder %s431, 3
        %s433 = scalar_select %p432, %s431, 3
        %s434 = smul.u32 128, %s433
        %v435 = vld [vmem:[%s424] sm:$0xff]
        %v436 = vld [vmem:[%s424 + $0x8] sm:$0xff]
        %v437 = vld [vmem:[%s424 + $0x10] sm:$0xff]
        %v438 = vld [vmem:[%s1] sm:$0xff]
        %v439 = vld [vmem:[%s1 + $0x8] sm:$0xff]
        %v440 = vld [vmem:[%s1 + $0x10] sm:$0x7]
        %v441 = vld [vmem:[%s2] sm:$0x1]
        %v443 = vlaneseq
        %v444 = vshrl.u32 %v443, 7
        %v445 = vsub.s32 0, %v444
        %v446 = vrot.slane %v441, %v445
        %vm448 = vcmask 154624
        %v450 = vsel %vm448, %v435, 0
        %v453 = vsel %vm448, %v436, 0
        %v456 = vsel %vm448, %v437, 0
        %vm458 = vcmask 1042432
        %v460 = vsel %vm458, %v440, 0
        %462 = vmatprep.subr.mxu0 0.0
        %463 = vmatpush1.msra.mxu0 %v438
        %464 = vmatprep.subr.mxu0 0.0
        %465 = vmatpush1.msra.mxu0 %v439
        %466 = vmatprep.subr.mxu0 0.0
        %467 = vmatpush1.msra.mxu0 %v460
        %468 = vmatprep.subr.mxu0 0.0
        %469 = vmatpush1.msra.mxu0 0.0
        %470 = vmatprep.subr.mxu0 0.0
        %471 = vmatpush1.msra.mxu0 0.0
        %472 = vmatprep.subr.mxu0 0.0
        %473 = vmatpush1.msra.mxu0 0.0
        %474 = vmatprep.subr.mxu0 0.0
        %475 = vmatpush1.msra.mxu0 0.0
        %476 = vmatprep.subr.mxu0 0.0
        %477 = vmatpush1.msra.mxu0 0.0
        %478 = vmatprep.subr.mxu0 0.0
        %479 = vmatpush1.msra.mxu0 0.0
        %480 = vmatprep.subr.mxu0 0.0
        %481 = vmatpush1.msra.mxu0 0.0
        %482 = vmatprep.subr.mxu0 0.0
        %483 = vmatpush1.msra.mxu0 0.0
        %484 = vmatprep.subr.mxu0 0.0
        %485 = vmatpush1.msra.mxu0 0.0
        %486 = vmatprep.subr.mxu0 0.0
        %487 = vmatpush1.msra.mxu0 0.0
        %488 = vmatprep.subr.mxu0 0.0
        %489 = vmatpush1.msra.mxu0 0.0
        %490 = vmatprep.subr.mxu0 0.0
        %491 = vmatpush1.msra.mxu0 0.0
        %492 = vmatprep.subr.mxu0 0.0
        %493 = vmatpush1.msra.mxu0 0.0
        %494 = vmatprep.subr.mxu0 0.0
        %495 = vmatpush1.msra.mxu0 0.0
        %496 = vmatprep.subr.mxu0 0.0
        %497 = vmatpush1.msra.mxu0 0.0
        %498 = vmatprep.subr.mxu0 0.0
        %499 = vmatpush1.msra.mxu0 0.0
        %500 = vmatprep.subr.mxu0 0.0
        %501 = vmatpush1.msra.mxu0 0.0
        %502 = vmatprep.subr.mxu0 0.0
        %503 = vmatpush1.msra.mxu0 0.0
        %504 = vmatprep.subr.mxu0 0.0
        %505 = vmatpush1.msra.mxu0 0.0
        %506 = vmatprep.subr.mxu0 0.0
        %507 = vmatpush1.msra.mxu0 0.0
        %508 = vmatprep.subr.mxu0 0.0
        %509 = vmatpush1.msra.mxu0 0.0
        %510 = vmatprep.subr.mxu0 0.0
        %511 = vmatpush1.msra.mxu0 0.0
        %512 = vmatprep.subr.mxu0 0.0
        %513 = vmatpush1.msra.mxu0 0.0
        %514 = vmatprep.subr.mxu0 0.0
        %515 = vmatpush1.msra.mxu0 0.0
        %516 = vmatprep.subr.mxu0 0.0
        %517 = vmatpush1.msra.mxu0 0.0
        %518 = vmatprep.subr.mxu0 0.0
        %519 = vmatpush1.msra.mxu0 0.0
        %520 = vmatprep.subr.mxu0 0.0
        %521 = vmatpush1.msra.mxu0 0.0
        %522 = vmatprep.subr.mxu0 0.0
        %523 = vmatpush1.msra.mxu0 0.0
        %524 = vmatprep.subr.mxu0 0.0
        %525 = vmatpush1.msra.mxu0 0.0
        %526 = vmatprep.mubr.f32.mxu0 0.0
        %527 = vmatmul.mubr.f32.gmra.mrb[0].mxu0 %v450
        %v528 = vpop.f32.mrb[0].mxu0
        %v529 = vadd.f32 %v446, %v528
        %v530 = vpop.f32.mrb[0].mxu0
        %531 = vmatprep.mubr.f32.mxu0 0.0
        %532 = vmatmul.mubr.f32.gmra.mrb[0].mxu0 %v453
        %v533 = vpop.f32.mrb[0].mxu0
        %v534 = vadd.f32 %v446, %v533
        %v535 = vpop.f32.mrb[0].mxu0
        %536 = vmatprep.mubr.f32.mxu0 0.0
        %537 = vmatmul.mubr.f32.gmra.mrb[0].mxu0 %v456
        %v538 = vpop.f32.mrb[0].mxu0
        %v539 = vadd.f32 %v446, %v538
        %v540 = vpop.f32.mrb[0].mxu0
        %541 = vdwg.mxu0
        %v542 = vmax.f32 %v529, 0.0
        %v543 = vmax.f32 %v534, 0.0
        %v544 = vmax.f32 %v539, 0.0
        %v545 = vld [vmem:[%s3] sm:$0xff]
        %v546 = vld [vmem:[%s3 + $0x8] sm:$0xff]
        %v547 = vld [vmem:[%s3 + $0x10] sm:$0xff]
        %v548 = vld [vmem:[%s3 + $0x18] sm:$0xff]
        %v549 = vld [vmem:[%s3 + $0x20] sm:$0xff]
        %v550 = vld [vmem:[%s3 + $0x28] sm:$0xff]
        %v551 = vld [vmem:[%s3 + $0x30] sm:$0xff]
        %v552 = vld [vmem:[%s3 + $0x38] sm:$0xff]
        %v553 = vld [vmem:[%s4] sm:$0x1]
        %v555 = vlaneseq
        %v556 = vshrl.u32 %v555, 7
        %v557 = vsub.s32 0, %v556
        %v558 = vrot.slane %v553, %v557
        %vm560 = vcmask 523264
        %v562 = vsel %vm560, %v542, 0
        %v565 = vsel %vm560, %v543, 0
        %v568 = vsel %vm560, %v544, 0
        %570 = vmatprep.subr.mxu0 0.0
        %571 = vmatpush1.msra.mxu0 %v545
        %572 = vmatprep.subr.mxu0 0.0
        %573 = vmatpush1.msra.mxu0 %v546
        %574 = vmatprep.subr.mxu0 0.0
        %575 = vmatpush1.msra.mxu0 %v547
        %576 = vmatprep.subr.mxu0 0.0
        %577 = vmatpush1.msra.mxu0 %v548
        %578 = vmatprep.subr.mxu0 0.0
        %579 = vmatpush1.msra.mxu0 %v549
        %580 = vmatprep.subr.mxu0 0.0
        %581 = vmatpush1.msra.mxu0 %v550
        %582 = vmatprep.subr.mxu0 0.0
        %583 = vmatpush1.msra.mxu0 %v551
        %584 = vmatprep.subr.mxu0 0.0
        %585 = vmatpush1.msra.mxu0 %v552
        %586 = vmatprep.subr.mxu0 0.0
        %587 = vmatpush1.msra.mxu0 0.0
        %588 = vmatprep.subr.mxu0 0.0
        %589 = vmatpush1.msra.mxu0 0.0
        %590 = vmatprep.subr.mxu0 0.0
        %591 = vmatpush1.msra.mxu0 0.0
        %592 = vmatprep.subr.mxu0 0.0
        %593 = vmatpush1.msra.mxu0 0.0
        %594 = vmatprep.subr.mxu0 0.0
        %595 = vmatpush1.msra.mxu0 0.0
        %596 = vmatprep.subr.mxu0 0.0
        %597 = vmatpush1.msra.mxu0 0.0
        %598 = vmatprep.subr.mxu0 0.0
        %599 = vmatpush1.msra.mxu0 0.0
        %600 = vmatprep.subr.mxu0 0.0
        %601 = vmatpush1.msra.mxu0 0.0
        %602 = vmatprep.subr.mxu0 0.0
        %603 = vmatpush1.msra.mxu0 0.0
        %604 = vmatprep.subr.mxu0 0.0
        %605 = vmatpush1.msra.mxu0 0.0
        %606 = vmatprep.subr.mxu0 0.0
        %607 = vmatpush1.msra.mxu0 0.0
        %608 = vmatprep.subr.mxu0 0.0
        %609 = vmatpush1.msra.mxu0 0.0
        %610 = vmatprep.subr.mxu0 0.0
        %611 = vmatpush1.msra.mxu0 0.0
        %612 = vmatprep.subr.mxu0 0.0
        %613 = vmatpush1.msra.mxu0 0.0
        %614 = vmatprep.subr.mxu0 0.0
        %615 = vmatpush1.msra.mxu0 0.0
        %616 = vmatprep.subr.mxu0 0.0
        %617 = vmatpush1.msra.mxu0 0.0
        %618 = vmatprep.subr.mxu0 0.0
        %619 = vmatpush1.msra.mxu0 0.0
        %620 = vmatprep.subr.mxu0 0.0
        %621 = vmatpush1.msra.mxu0 0.0
        %622 = vmatprep.subr.mxu0 0.0
        %623 = vmatpush1.msra.mxu0 0.0
        %624 = vmatprep.subr.mxu0 0.0
        %625 = vmatpush1.msra.mxu0 0.0
        %626 = vmatprep.subr.mxu0 0.0
        %627 = vmatpush1.msra.mxu0 0.0
        %628 = vmatprep.subr.mxu0 0.0
        %629 = vmatpush1.msra.mxu0 0.0
        %630 = vmatprep.subr.mxu0 0.0
        %631 = vmatpush1.msra.mxu0 0.0
        %632 = vmatprep.subr.mxu0 0.0
        %633 = vmatpush1.msra.mxu0 0.0
        %634 = vmatprep.mubr.f32.mxu0 0.0
        %635 = vmatmul.mubr.f32.gmra.mrb[0].mxu0 %v562
        %v636 = vpop.f32.mrb[0].mxu0
        %v637 = vadd.f32 %v558, %v636
        %v638 = vpop.f32.mrb[0].mxu0
        %639 = vmatprep.mubr.f32.mxu0 0.0
        %640 = vmatmul.mubr.f32.gmra.mrb[0].mxu0 %v565
        %v641 = vpop.f32.mrb[0].mxu0
        %v642 = vadd.f32 %v558, %v641
        %v643 = vpop.f32.mrb[0].mxu0
        %644 = vmatprep.mubr.f32.mxu0 0.0
        %645 = vmatmul.mubr.f32.gmra.mrb[0].mxu0 %v568
        %v646 = vpop.f32.mrb[0].mxu0
        %v647 = vadd.f32 %v558, %v646
        %v648 = vpop.f32.mrb[0].mxu0
        %649 = vdwg.mxu0
        %v650 = vmax.f32 %v637, 0.0
        %v651 = vmax.f32 %v642, 0.0
        %v652 = vmax.f32 %v647, 0.0
        %v653 = vld [vmem:[%s6] sm:$0xff]
        %v654 = vld [vmem:[%s6 + $0x8] sm:$0xff]
        %v655 = vld [vmem:[%s6 + $0x10] sm:$0xff]
        %vm656 = vcmask 195584
        %v658 = vsel %vm656, %v650, 0
        %v661 = vsel %vm656, %v651, 0
        %v664 = vsel %vm656, %v652, 0
        %666 = vmatprep.subr.mxu0 0.0
        %667 = vmatpush1.msra.mxu0 %v653
        %668 = vmatprep.subr.mxu0 0.0
        %669 = vmatpush1.msra.mxu0 %v654
        %670 = vmatprep.subr.mxu0 0.0
        %671 = vmatpush1.msra.mxu0 %v655
        %672 = vmatprep.subr.mxu0 0.0
        %673 = vmatpush1.msra.mxu0 0.0
        %674 = vmatprep.subr.mxu0 0.0
        %675 = vmatpush1.msra.mxu0 0.0
        %676 = vmatprep.subr.mxu0 0.0
        %677 = vmatpush1.msra.mxu0 0.0
        %678 = vmatprep.subr.mxu0 0.0
        %679 = vmatpush1.msra.mxu0 0.0
        %680 = vmatprep.subr.mxu0 0.0
        %681 = vmatpush1.msra.mxu0 0.0
        %682 = vmatprep.subr.mxu0 0.0
        %683 = vmatpush1.msra.mxu0 0.0
        %684 = vmatprep.subr.mxu0 0.0
        %685 = vmatpush1.msra.mxu0 0.0
        %686 = vmatprep.subr.mxu0 0.0
        %687 = vmatpush1.msra.mxu0 0.0
        %688 = vmatprep.subr.mxu0 0.0
        %689 = vmatpush1.msra.mxu0 0.0
        %690 = vmatprep.subr.mxu0 0.0
        %691 = vmatpush1.msra.mxu0 0.0
        %692 = vmatprep.subr.mxu0 0.0
        %693 = vmatpush1.msra.mxu0 0.0
        %694 = vmatprep.subr.mxu0 0.0
        %695 = vmatpush1.msra.mxu0 0.0
        %696 = vmatprep.subr.mxu0 0.0
        %697 = vmatpush1.msra.mxu0 0.0
        %698 = vmatprep.subr.mxu0 0.0
        %699 = vmatpush1.msra.mxu0 0.0
        %700 = vmatprep.subr.mxu0 0.0
        %701 = vmatpush1.msra.mxu0 0.0
        %702 = vmatprep.subr.mxu0 0.0
        %703 = vmatpush1.msra.mxu0 0.0
        %704 = vmatprep.subr.mxu0 0.0
        %705 = vmatpush1.msra.mxu0 0.0
        %706 = vmatprep.subr.mxu0 0.0
        %707 = vmatpush1.msra.mxu0 0.0
        %708 = vmatprep.subr.mxu0 0.0
        %709 = vmatpush1.msra.mxu0 0.0
        %710 = vmatprep.subr.mxu0 0.0
        %711 = vmatpush1.msra.mxu0 0.0
        %712 = vmatprep.subr.mxu0 0.0
        %713 = vmatpush1.msra.mxu0 0.0
        %714 = vmatprep.subr.mxu0 0.0
        %715 = vmatpush1.msra.mxu0 0.0
        %716 = vmatprep.subr.mxu0 0.0
        %717 = vmatpush1.msra.mxu0 0.0
        %718 = vmatprep.subr.mxu0 0.0
        %719 = vmatpush1.msra.mxu0 0.0
        %720 = vmatprep.subr.mxu0 0.0
        %721 = vmatpush1.msra.mxu0 0.0
        %722 = vmatprep.subr.mxu0 0.0
        %723 = vmatpush1.msra.mxu0 0.0
        %724 = vmatprep.subr.mxu0 0.0
        %725 = vmatpush1.msra.mxu0 0.0
        %726 = vmatprep.subr.mxu0 0.0
        %727 = vmatpush1.msra.mxu0 0.0
        %728 = vmatprep.subr.mxu0 0.0
        %729 = vmatpush1.msra.mxu0 0.0
        %730 = vmatprep.mubr.f32.mxu0 0.0
        %731 = vmatmul.mubr.f32.gmra.mrb[0].mxu0 %v658
        %v732 = vpop.f32.mrb[0].mxu0
        %v733 = vadd.f32 0.0, %v732
        %v734 = vpop.f32.mrb[0].mxu0
        %735 = vmatprep.mubr.f32.mxu0 0.0
        %736 = vmatmul.mubr.f32.gmra.mrb[0].mxu0 %v661
        %v737 = vpop.f32.mrb[0].mxu0
        %v738 = vadd.f32 0.0, %v737
        %v739 = vpop.f32.mrb[0].mxu0
        %740 = vmatprep.mubr.f32.mxu0 0.0
        %741 = vmatmul.mubr.f32.gmra.mrb[0].mxu0 %v664
        %v742 = vpop.f32.mrb[0].mxu0
        %v743 = vadd.f32 0.0, %v742
        %v744 = vpop.f32.mrb[0].mxu0
        %745 = vdwg.mxu0
        %v746 = vld [vmem:[%s5] sm:$0x1]
        %747 = vset.pattern.permute.xlu0 0
        %748 = vperm.xlu0 %747, %v435
        %v749 = vpop.permute.xlu0 %748
        %751 = vset.pattern.permute.xlu0 0
        %752 = vperm.xlu0 %751, %v436
        %v753 = vpop.permute.xlu0 %752
        %755 = vset.pattern.permute.xlu0 0
        %756 = vperm.xlu0 %755, %v437
        %v757 = vpop.permute.xlu0 %756
        %v760 = vlaneseq
        %v761 = vshrl.u32 %v760, 7
        %v762 = vsub.s32 0, %v761
        %v763 = vrot.slane %v746, %v762
        %v765 = vmul.f32 %v749, %v763
        %v766 = vmul.f32 %v753, %v763
        %v767 = vmul.f32 %v757, %v763
        %v768 = vadd.f32 %v765, %v733
        %v769 = vadd.f32 %v766, %v738
        %v770 = vadd.f32 %v767, %v743
        %v771 = vld [vmem:[%s7] sm:$0x1]
        %v773 = vlaneseq
        %v774 = vshrl.u32 %v773, 7
        %v775 = vsub.s32 0, %v774
        %v776 = vrot.slane %v771, %v775
        %v778 = vadd.f32 %v768, %v776
        %v779 = vadd.f32 %v769, %v776
        %v780 = vadd.f32 %v770, %v776
        %v781 = vmax.f32 %v778, 0.0
        %v782 = vmax.f32 %v779, 0.0
        %v783 = vmax.f32 %v780, 0.0
        %v784 = vld [vmem:[%s8] sm:$0xff]
        %v785 = vld [vmem:[%s8 + $0x8] sm:$0xff]
        %v786 = vld [vmem:[%s8 + $0x10] sm:$0xff]
        %v787 = vld [vmem:[%s8 + $0x18] sm:$0xff]
        %v788 = vld [vmem:[%s9] sm:$0x1]
        %v790 = vlaneseq
        %v791 = vshrl.u32 %v790, 7
        %v792 = vsub.s32 0, %v791
        %v793 = vrot.slane %v788, %v792
        %vm795 = vcmask 261120
        %v797 = vsel %vm795, %v781, 0
        %v800 = vsel %vm795, %v782, 0
        %v803 = vsel %vm795, %v783, 0
        %805 = vmatprep.subr.mxu0 0.0
        %806 = vmatpush1.msra.mxu0 %v784
        %807 = vmatprep.subr.mxu0 0.0
        %808 = vmatpush1.msra.mxu0 %v785
        %809 = vmatprep.subr.mxu0 0.0
        %810 = vmatpush1.msra.mxu0 %v786
        %811 = vmatprep.subr.mxu0 0.0
        %812 = vmatpush1.msra.mxu0 %v787
        %813 = vmatprep.subr.mxu0 0.0
        %814 = vmatpush1.msra.mxu0 0.0
        %815 = vmatprep.subr.mxu0 0.0
        %816 = vmatpush1.msra.mxu0 0.0
        %817 = vmatprep.subr.mxu0 0.0
        %818 = vmatpush1.msra.mxu0 0.0
        %819 = vmatprep.subr.mxu0 0.0
        %820 = vmatpush1.msra.mxu0 0.0
        %821 = vmatprep.subr.mxu0 0.0
        %822 = vmatpush1.msra.mxu0 0.0
        %823 = vmatprep.subr.mxu0 0.0
        %824 = vmatpush1.msra.mxu0 0.0
        %825 = vmatprep.subr.mxu0 0.0
        %826 = vmatpush1.msra.mxu0 0.0
        %827 = vmatprep.subr.mxu0 0.0
        %828 = vmatpush1.msra.mxu0 0.0
        %829 = vmatprep.subr.mxu0 0.0
        %830 = vmatpush1.msra.mxu0 0.0
        %831 = vmatprep.subr.mxu0 0.0
        %832 = vmatpush1.msra.mxu0 0.0
        %833 = vmatprep.subr.mxu0 0.0
        %834 = vmatpush1.msra.mxu0 0.0
        %835 = vmatprep.subr.mxu0 0.0
        %836 = vmatpush1.msra.mxu0 0.0
        %837 = vmatprep.subr.mxu0 0.0
        %838 = vmatpush1.msra.mxu0 0.0
        %839 = vmatprep.subr.mxu0 0.0
        %840 = vmatpush1.msra.mxu0 0.0
        %841 = vmatprep.subr.mxu0 0.0
        %842 = vmatpush1.msra.mxu0 0.0
        %843 = vmatprep.subr.mxu0 0.0
        %844 = vmatpush1.msra.mxu0 0.0
        %845 = vmatprep.subr.mxu0 0.0
        %846 = vmatpush1.msra.mxu0 0.0
        %847 = vmatprep.subr.mxu0 0.0
        %848 = vmatpush1.msra.mxu0 0.0
        %849 = vmatprep.subr.mxu0 0.0
        %850 = vmatpush1.msra.mxu0 0.0
        %851 = vmatprep.subr.mxu0 0.0
        %852 = vmatpush1.msra.mxu0 0.0
        %853 = vmatprep.subr.mxu0 0.0
        %854 = vmatpush1.msra.mxu0 0.0
        %855 = vmatprep.subr.mxu0 0.0
        %856 = vmatpush1.msra.mxu0 0.0
        %857 = vmatprep.subr.mxu0 0.0
        %858 = vmatpush1.msra.mxu0 0.0
        %859 = vmatprep.subr.mxu0 0.0
        %860 = vmatpush1.msra.mxu0 0.0
        %861 = vmatprep.subr.mxu0 0.0
        %862 = vmatpush1.msra.mxu0 0.0
        %863 = vmatprep.subr.mxu0 0.0
        %864 = vmatpush1.msra.mxu0 0.0
        %865 = vmatprep.subr.mxu0 0.0
        %866 = vmatpush1.msra.mxu0 0.0
        %867 = vmatprep.subr.mxu0 0.0
        %868 = vmatpush1.msra.mxu0 0.0
        %869 = vmatprep.mubr.f32.mxu0 0.0
        %870 = vmatmul.mubr.f32.gmra.mrb[0].mxu0 %v797
        %v871 = vpop.f32.mrb[0].mxu0
        %v872 = vadd.f32 %v793, %v871
        %v873 = vpop.f32.mrb[0].mxu0
        %874 = vmatprep.mubr.f32.mxu0 0.0
        %875 = vmatmul.mubr.f32.gmra.mrb[0].mxu0 %v800
        %v876 = vpop.f32.mrb[0].mxu0
        %v877 = vadd.f32 %v793, %v876
        %v878 = vpop.f32.mrb[0].mxu0
        %879 = vmatprep.mubr.f32.mxu0 0.0
        %880 = vmatmul.mubr.f32.gmra.mrb[0].mxu0 %v803
        %v881 = vpop.f32.mrb[0].mxu0
        %v882 = vadd.f32 %v793, %v881
        %v883 = vpop.f32.mrb[0].mxu0
        %884 = vdwg.mxu0
        %v885 = vmax.f32 %v872, 0.0
        %v886 = vmax.f32 %v877, 0.0
        %v887 = vmax.f32 %v882, 0.0
        %v888 = vld [vmem:[%s10] sm:$0xff]
        %v889 = vld [vmem:[%s10 + $0x8] sm:$0xff]
        %893 = vrot.lane.b32.xlu0 %v733, 96
        %v894 = vpop.permute.xlu0 %893
        %895 = vrot.lane.b32.xlu0 %v738, 96
        %v896 = vpop.permute.xlu0 %895
        %897 = vrot.lane.b32.xlu0 %v743, 96
        %v898 = vpop.permute.xlu0 %897
        %vm902 = vcmask 130048
        %v904 = vsel %vm902, %v885, 0
        %v907 = vsel %vm902, %v886, 0
        %v910 = vsel %vm902, %v887, 0
        %912 = vmatprep.subr.mxu0 0.0
        %913 = vmatpush1.msra.mxu0 %v888
        %914 = vmatprep.subr.mxu0 0.0
        %915 = vmatpush1.msra.mxu0 %v889
        %916 = vmatprep.subr.mxu0 0.0
        %917 = vmatpush1.msra.mxu0 0.0
        %918 = vmatprep.subr.mxu0 0.0
        %919 = vmatpush1.msra.mxu0 0.0
        %920 = vmatprep.subr.mxu0 0.0
        %921 = vmatpush1.msra.mxu0 0.0
        %922 = vmatprep.subr.mxu0 0.0
        %923 = vmatpush1.msra.mxu0 0.0
        %924 = vmatprep.subr.mxu0 0.0
        %925 = vmatpush1.msra.mxu0 0.0
        %926 = vmatprep.subr.mxu0 0.0
        %927 = vmatpush1.msra.mxu0 0.0
        %928 = vmatprep.subr.mxu0 0.0
        %929 = vmatpush1.msra.mxu0 0.0
        %930 = vmatprep.subr.mxu0 0.0
        %931 = vmatpush1.msra.mxu0 0.0
        %932 = vmatprep.subr.mxu0 0.0
        %933 = vmatpush1.msra.mxu0 0.0
        %934 = vmatprep.subr.mxu0 0.0
        %935 = vmatpush1.msra.mxu0 0.0
        %936 = vmatprep.subr.mxu0 0.0
        %937 = vmatpush1.msra.mxu0 0.0
        %938 = vmatprep.subr.mxu0 0.0
        %939 = vmatpush1.msra.mxu0 0.0
        %940 = vmatprep.subr.mxu0 0.0
        %941 = vmatpush1.msra.mxu0 0.0
        %942 = vmatprep.subr.mxu0 0.0
        %943 = vmatpush1.msra.mxu0 0.0
        %944 = vmatprep.subr.mxu0 0.0
        %945 = vmatpush1.msra.mxu0 0.0
        %946 = vmatprep.subr.mxu0 0.0
        %947 = vmatpush1.msra.mxu0 0.0
        %948 = vmatprep.subr.mxu0 0.0
        %949 = vmatpush1.msra.mxu0 0.0
        %950 = vmatprep.subr.mxu0 0.0
        %951 = vmatpush1.msra.mxu0 0.0
        %952 = vmatprep.subr.mxu0 0.0
        %953 = vmatpush1.msra.mxu0 0.0
        %954 = vmatprep.subr.mxu0 0.0
        %955 = vmatpush1.msra.mxu0 0.0
        %956 = vmatprep.subr.mxu0 0.0
        %957 = vmatpush1.msra.mxu0 0.0
        %958 = vmatprep.subr.mxu0 0.0
        %959 = vmatpush1.msra.mxu0 0.0
        %960 = vmatprep.subr.mxu0 0.0
        %961 = vmatpush1.msra.mxu0 0.0
        %962 = vmatprep.subr.mxu0 0.0
        %963 = vmatpush1.msra.mxu0 0.0
        %964 = vmatprep.subr.mxu0 0.0
        %965 = vmatpush1.msra.mxu0 0.0
        %966 = vmatprep.subr.mxu0 0.0
        %967 = vmatpush1.msra.mxu0 0.0
        %968 = vmatprep.subr.mxu0 0.0
        %969 = vmatpush1.msra.mxu0 0.0
        %970 = vmatprep.subr.mxu0 0.0
        %971 = vmatpush1.msra.mxu0 0.0
        %972 = vmatprep.subr.mxu0 0.0
        %973 = vmatpush1.msra.mxu0 0.0
        %974 = vmatprep.subr.mxu0 0.0
        %975 = vmatpush1.msra.mxu0 0.0
        %976 = vmatprep.mubr.f32.mxu0 0.0
        %977 = vmatmul.mubr.f32.gmra.mrb[0].mxu0 %v904
        %v978 = vpop.f32.mrb[0].mxu0
        %v979 = vadd.f32 %v894, %v978
        %v980 = vpop.f32.mrb[0].mxu0
        %981 = vmatprep.mubr.f32.mxu0 0.0
        %982 = vmatmul.mubr.f32.gmra.mrb[0].mxu0 %v907
        %v983 = vpop.f32.mrb[0].mxu0
        %v984 = vadd.f32 %v896, %v983
        %v985 = vpop.f32.mrb[0].mxu0
        %986 = vmatprep.mubr.f32.mxu0 0.0
        %987 = vmatmul.mubr.f32.gmra.mrb[0].mxu0 %v910
        %v988 = vpop.f32.mrb[0].mxu0
        %v989 = vadd.f32 %v898, %v988
        %v990 = vpop.f32.mrb[0].mxu0
        %991 = vdwg.mxu0
        %v992 = vld [vmem:[%s11] sm:$0x1]
        %v994 = vlaneseq
        %v995 = vshrl.u32 %v994, 7
        %v996 = vsub.s32 0, %v995
        %v997 = vrot.slane %v992, %v996
        %v999 = vadd.f32 %v979, %v997
        %v1000 = vadd.f32 %v984, %v997
        %v1001 = vadd.f32 %v989, %v997
        %vm1002 = vcmask 48128
        %1003 = vst.msk [vmem:[%s415] sm:$0xff] %vm1002, %v999
        %1004 = vst.msk [vmem:[%s415 + $0x8] sm:$0xff] %vm1002, %v1000
        %1005 = vst.msk [vmem:[%s415 + $0x10] sm:$0xff] %vm1002, %v1001
        %s1006 = sand.u32 %s288, 1
        %s1007 = sand.u32 %s288, 1
        %s1008 = smul.addr %s1007, 24
        %s1009 = scalar_lea.vmem [#allocation2], %s1008
        // Predicated region
        $region69: #{tpu_custom_call.1} parent=67 // pred_check
          %p1010 = pneg %p298
        $region70: #{tpu_custom_call.1} parent=67 // pred_check_branch
          %1012 = sbr.rel (%p1010) target = $region72
        $region71: #{tpu_custom_call.1} parent=67 // pred_region
          %s1013 = smul.u32 3, %s23
          %s1014 = ssub.s32 5, %s1013
          %p1015 = scmp.lt.s32.totalorder %s1014, 3
          %s1016 = scalar_select %p1015, %s1014, 3
          %s1017 = smul.u32 128, %s1016
          %p1018 = scmp.ne.s32.totalorder 0, %s1017
          %s1019 = smul.addr %s1013, 8
          %s1020 = scalar_lea.vmem %s12, %s1019
          // Predicated region
          $region73: #{tpu_custom_call.1} parent=71 // pred_check
            %p1021 = pneg %p1018
          $region74: #{tpu_custom_call.1} parent=71 // pred_check_branch
            %1023 = sbr.rel (%p1021) target = $region76
          $region75: #{tpu_custom_call.1} parent=71 // pred_region
            // Predicated region
            $region77: #{tpu_custom_call.1} parent=75 // pred_check
              _
            $region78: #{tpu_custom_call.1} parent=75 // pred_check_branch
              %1025 = sbr.rel (0) target = $region80
            $region79: #{tpu_custom_call.1} parent=75 // pred_region
              // Predicated region
              $region99: #{tpu_custom_call.1} parent=79 // pred_check
                _
              $region100: #{tpu_custom_call.1} parent=79 // pred_check_branch
                %1079 = sbr.rel (0) target = $region102
              $region101: #{tpu_custom_call.1} parent=79 // pred_region
                %s1080 = sdiv.u32.pop %s1016, 3
                %s1081 = srem.u32.pop %s1016, 3
                // While loop
                $region103: #{tpu_custom_call.1} parent=101 // loop_pre_header
                  _
                $region104: #{tpu_custom_call.1} parent=101 // loop_header
                  %s1083 = sphi 0, %s1085
                  %p1084 = scmp.ge.s32.totalorder %s1083, %s1080
                  %s1088 = sphi 0, %s1099
                  %s1089 = sphi %s1009, %s1102
                  %s1090 = sphi %s1020, %s1103
                $region105: #{tpu_custom_call.1} parent=101 // loop_header_branch
                  %1087 = sbr.rel (%p1084) target = $region109
                $region106: #{tpu_custom_call.1} parent=101 // loop_body
                  %v1091 = vld [vmem:[%s1089] sm:$0xff]
                  %1092 = vst [vmem:[%s1090] sm:$0xff] %v1091
                  %v1093 = vld [vmem:[%s1089 + $0x8] sm:$0xff]
                  %1094 = vst [vmem:[%s1090 + $0x8] sm:$0xff] %v1093
                  %v1095 = vld [vmem:[%s1089 + $0x10] sm:$0xff]
                  %1096 = vst [vmem:[%s1090 + $0x10] sm:$0xff] %v1095
                  %s1097 = sadd.s32 1, %s1088
                  %p1098 = scmp.ge.s32.totalorder %s1097, %s1080
                  %s1099 = scalar_select %p1098, 0, %s1097
                  %s1100 = smul.u32 %s1099, 24
                  %s1101 = smul.u32 %s1099, 24
                  %s1102 = scalar_lea.vmem %s1009, %s1100 [#allocation2]
                  %s1103 = scalar_lea.vmem %s1020, %s1101
                $region107: #{tpu_custom_call.1} parent=101 // loop_footer
                  %s1085 = sadd.s32 %s1083, 1
                $region108: #{tpu_custom_call.1} parent=101 // loop_footer_branch
                  %1082 = sbr.rel target = $region104
                $region109: #{tpu_custom_call.1} parent=101 // loop_exit
                  _
                %s1104 = sdiv.u32.pop %s1016, 3
                %s1105 = srem.u32.pop %s1016, 3
                %s1106 = smul.u32 %s1104, 3
                %s1107 = smul.u32 8, %s1106
                %s1108 = scalar_lea.vmem %s1009, %s1107 [#allocation2]
                %s1109 = smul.u32 8, %s1106
                %s1110 = scalar_lea.vmem %s1020, %s1109
                // While loop
                $region110: #{tpu_custom_call.1} parent=101 // loop_pre_header
                  _
                $region111: #{tpu_custom_call.1} parent=101 // loop_header
                  %s1112 = sphi 0, %s1114
                  %p1113 = scmp.ge.s32.totalorder %s1112, %s1105
                  %s1117 = sphi 0, %s1124
                  %s1118 = sphi %s1108, %s1127
                  %s1119 = sphi %s1110, %s1128
                $region112: #{tpu_custom_call.1} parent=101 // loop_header_branch
                  %1116 = sbr.rel (%p1113) target = $region116
                $region113: #{tpu_custom_call.1} parent=101 // loop_body
                  %v1120 = vld [vmem:[%s1118] sm:$0xff]
                  %1121 = vst [vmem:[%s1119] sm:$0xff] %v1120
                  %s1122 = sadd.s32 1, %s1117
                  %p1123 = scmp.ge.s32.totalorder %s1122, %s1105
                  %s1124 = scalar_select %p1123, 0, %s1122
                  %s1125 = smul.u32 %s1124, 8
                  %s1126 = smul.u32 %s1124, 8
                  %s1127 = scalar_lea.vmem %s1108, %s1125 [#allocation2]
                  %s1128 = scalar_lea.vmem %s1110, %s1126
                $region114: #{tpu_custom_call.1} parent=101 // loop_footer
                  %s1114 = sadd.s32 %s1112, 1
                $region115: #{tpu_custom_call.1} parent=101 // loop_footer_branch
                  %1111 = sbr.rel target = $region111
                $region116: #{tpu_custom_call.1} parent=101 // loop_exit
                  _
              $region102: #{tpu_custom_call.1} parent=79 // pred_fallthru
                _
              // Predicated region
              $region117: #{tpu_custom_call.1} parent=79 // pred_check
                _
              $region118: #{tpu_custom_call.1} parent=79 // pred_check_branch
                %1130 = sbr.rel target = $region120
              $region119: #{tpu_custom_call.1} parent=79 // pred_region
                _
              $region120: #{tpu_custom_call.1} parent=79 // pred_fallthru
                _
            $region80: #{tpu_custom_call.1} parent=75 // pred_fallthru
              _
            // Predicated region
            $region81: #{tpu_custom_call.1} parent=75 // pred_check
              _
            $region82: #{tpu_custom_call.1} parent=75 // pred_check_branch
              %1027 = sbr.rel target = $region84
            $region83: #{tpu_custom_call.1} parent=75 // pred_region
              %s1029 = sdiv.u32.pop %s1016, 3
              %s1030 = srem.u32.pop %s1016, 3
              // While loop
              $region85: #{tpu_custom_call.1} parent=83 // loop_pre_header
                _
              $region86: #{tpu_custom_call.1} parent=83 // loop_header
                %s1032 = sphi 0, %s1034
                %p1033 = scmp.ge.s32.totalorder %s1032, %s1029
                %s1037 = sphi 0, %s1048
                %s1038 = sphi %s1009, %s1051
                %s1039 = sphi %s1020, %s1052
              $region87: #{tpu_custom_call.1} parent=83 // loop_header_branch
                %1036 = sbr.rel (%p1033) target = $region91
              $region88: #{tpu_custom_call.1} parent=83 // loop_body
                %v1040 = vld [vmem:[%s1038] sm:$0xff]
                %1041 = vst [vmem:[%s1039] sm:$0xff] %v1040
                %v1042 = vld [vmem:[%s1038 + $0x8] sm:$0xff]
                %1043 = vst [vmem:[%s1039 + $0x8] sm:$0xff] %v1042
                %v1044 = vld [vmem:[%s1038 + $0x10] sm:$0xff]
                %1045 = vst [vmem:[%s1039 + $0x10] sm:$0xff] %v1044
                %s1046 = sadd.s32 1, %s1037
                %p1047 = scmp.ge.s32.totalorder %s1046, %s1029
                %s1048 = scalar_select %p1047, 0, %s1046
                %s1049 = smul.u32 %s1048, 24
                %s1050 = smul.u32 %s1048, 24
                %s1051 = scalar_lea.vmem %s1009, %s1049 [#allocation2]
                %s1052 = scalar_lea.vmem %s1020, %s1050
              $region89: #{tpu_custom_call.1} parent=83 // loop_footer
                %s1034 = sadd.s32 %s1032, 1
              $region90: #{tpu_custom_call.1} parent=83 // loop_footer_branch
                %1031 = sbr.rel target = $region86
              $region91: #{tpu_custom_call.1} parent=83 // loop_exit
                _
              %s1053 = sdiv.u32.pop %s1016, 3
              %s1054 = srem.u32.pop %s1016, 3
              %s1055 = smul.u32 %s1053, 3
              %s1056 = smul.u32 8, %s1055
              %s1057 = scalar_lea.vmem %s1009, %s1056 [#allocation2]
              %s1058 = smul.u32 8, %s1055
              %s1059 = scalar_lea.vmem %s1020, %s1058
              // While loop
              $region92: #{tpu_custom_call.1} parent=83 // loop_pre_header
                _
              $region93: #{tpu_custom_call.1} parent=83 // loop_header
                %s1061 = sphi 0, %s1063
                %p1062 = scmp.ge.s32.totalorder %s1061, %s1054
                %s1066 = sphi 0, %s1073
                %s1067 = sphi %s1057, %s1076
                %s1068 = sphi %s1059, %s1077
              $region94: #{tpu_custom_call.1} parent=83 // loop_header_branch
                %1065 = sbr.rel (%p1062) target = $region98
              $region95: #{tpu_custom_call.1} parent=83 // loop_body
                %v1069 = vld [vmem:[%s1067] sm:$0xff]
                %1070 = vst [vmem:[%s1068] sm:$0xff] %v1069
                %s1071 = sadd.s32 1, %s1066
                %p1072 = scmp.ge.s32.totalorder %s1071, %s1054
                %s1073 = scalar_select %p1072, 0, %s1071
                %s1074 = smul.u32 %s1073, 8
                %s1075 = smul.u32 %s1073, 8
                %s1076 = scalar_lea.vmem %s1057, %s1074 [#allocation2]
                %s1077 = scalar_lea.vmem %s1059, %s1075
              $region96: #{tpu_custom_call.1} parent=83 // loop_footer
                %s1063 = sadd.s32 %s1061, 1
              $region97: #{tpu_custom_call.1} parent=83 // loop_footer_branch
                %1060 = sbr.rel target = $region93
              $region98: #{tpu_custom_call.1} parent=83 // loop_exit
                _
            $region84: #{tpu_custom_call.1} parent=75 // pred_fallthru
              _
          $region76: #{tpu_custom_call.1} parent=71 // pred_fallthru
            _
          %1131 = vnop
        $region72: #{tpu_custom_call.1} parent=67 // pred_fallthru
          _
      $region68: #{tpu_custom_call.1} parent=5 // pred_fallthru
        _
      %p1132 = scmp.le.s32.totalorder 2, %s18
      // Predicated region
      $region121: #{tpu_custom_call.1} parent=5 // pred_check
        %p1133 = pneg %p1132
      $region122: #{tpu_custom_call.1} parent=5 // pred_check_branch
        %1135 = sbr.rel (%p1133) target = $region124
      $region123: #{tpu_custom_call.1} parent=5 // pred_region
        %s1136 = ssub.s32 %s18, 2
        // Predicated region
        $region125: #{tpu_custom_call.1} parent=123 // pred_check
          %p1137 = pneg %p304
        $region126: #{tpu_custom_call.1} parent=123 // pred_check_branch
          %1139 = sbr.rel (%p1137) target = $region128
        $region127: #{tpu_custom_call.1} parent=123 // pred_region
          %s1140 = sand.u32 %s289, 1
          %s1141 = sand.u32 %s289, 1
          %s1142 = smul.addr %s1141, 24
          %s1143 = scalar_lea.vmem [#allocation2], %s1142
        $region128: #{tpu_custom_call.1} parent=123 // pred_fallthru
          _
      $region124: #{tpu_custom_call.1} parent=5 // pred_fallthru
        _
    $region6: #{tpu_custom_call.1} parent=1 // loop_footer
      %s22 = sadd.s32 1, %s18
    $region7: #{tpu_custom_call.1} parent=1 // loop_footer_branch
      %17 = sbr.rel target = $region3
    $region8: #{tpu_custom_call.1} parent=1 // loop_exit
      _

</llo_original>
